<compile_context>
chip_gen: v7x
topology: tpu7x:2x2x1
jax: 0.10.0
libtpu: 0.0.40
codegen_flags: <defaults>
</compile_context>

<pallas_src>
import functools

import jax
import jax.numpy as jnp
from jax.experimental import pallas as pl
from jax.experimental.pallas import tpu as pltpu

LANE = 128
MAX_BLOCK_ROWS = 2048  # 2048 x 128 x 4B = 1 MiB per f32 input block


def _focal_loss_kernel(x_ref, t_ref, o_ref, acc_ref, *,
                       alpha, gamma, block_rows, n_elems):
    j = pl.program_id(0)          # parallel split axis (megacore on v7x)
    k = pl.program_id(1)          # sequential reduction axis
    n_inner = pl.num_programs(1)

    @pl.when(k == 0)
    def _():
        acc_ref[...] = jnp.zeros_like(acc_ref)

    # Source dtype is whatever the caller stored in HBM; cast on the VPU.
    p = x_ref[...].astype(jnp.float32)
    t = t_ref[...].astype(jnp.float32)

    # torch F.binary_cross_entropy clamps each log term at -100.
    log_p = jnp.maximum(jnp.log(p), -100.0)
    log_1mp = jnp.maximum(jnp.log(1.0 - p), -100.0)
    bce = -(t * log_p + (1.0 - t) * log_1mp)

    pt = p * t + (1.0 - p) * (1.0 - t)
    u = 1.0 - pt
    # Static specialisation: integer gamma -> repeated multiply (no pow, which
    # lowers to exp(gamma*log(x)) and adds 2 EUP transcendentals per element).
    if float(gamma).is_integer() and float(gamma) >= 0.0:
        g = int(gamma)
        w = jnp.ones_like(u) if g == 0 else u
        for _ in range(max(g - 1, 0)):
            w = w * u
    else:
        w = u ** gamma
    f_loss = w * bce
    if float(alpha) != 1.0:
        f_loss = alpha * f_loss

    # Mask out everything beyond the true element count: handles the ragged
    # last row-block (undefined data), clamped duplicate blocks on the split
    # axis, and the small in-row lane pad.  jnp.where is a select, so NaN/Inf
    # in the unselected branch is harmless.
    blk = j * n_inner + k                                   # intended (unclamped) block index
    row_in_blk = jax.lax.broadcasted_iota(jnp.int32, f_loss.shape, 0)
    lane = jax.lax.broadcasted_iota(jnp.int32, f_loss.shape, 1)
    # int32 index math: fine for inputs < 2**31 elements.
    gelem = (blk * block_rows + row_in_blk) * LANE + lane
    f_loss = jnp.where(gelem < n_elems, f_loss, 0.0)

    acc_ref[...] += f_loss

    @pl.when(k == n_inner - 1)
    def _():
        o_ref[0, 0] = jnp.sum(acc_ref[...])


def focal_loss_mean(inputs, targets, alpha=1.0, gamma=2.0,
                    max_block_rows=MAX_BLOCK_ROWS):
    """Focal loss, probabilities as input (logits=False), mean reduction."""
    # TODO(synk): logits=True and reduction in {'sum', 'none'} not implemented
    # (module defaults are logits=False, reduction='mean').
    assert inputs.shape == targets.shape
    n_elems = int(inputs.size)

    x = inputs.reshape(-1)                    # keep source dtype (no f32 upcast in HBM)
    t = targets.reshape(-1)
    if t.dtype == jnp.bool_:
        t = t.astype(x.dtype)

    # Only pad up to the next multiple of 128 lanes (<=127 elems) so the flat
    # array can be viewed as a lane-dense (rows, 128) slab.  Padded elements
    # are masked out in-kernel, so the pad value is irrelevant.
    # TODO(synk): avoid even this copy via manual DMA on the raw 1-D HBM ref.
    pad = (-n_elems) % LANE
    if pad:
        x = jnp.pad(x, (0, pad), constant_values=1)
        t = jnp.pad(t, (0, pad), constant_values=1)

    rows = x.shape[0] // LANE
    x2 = x.reshape(rows, LANE)
    t2 = t.reshape(rows, LANE)

    # Block: full slab if small, otherwise a large multiple-of-8 tile.
    block_rows = rows if rows <= max_block_rows else max_block_rows
    n_blocks = pl.cdiv(rows, block_rows)
    n_outer = 2 if n_blocks >= 2 else 1       # 2-way split (used by v7x megacore)
    n_inner = pl.cdiv(n_blocks, n_outer)

    def in_map(j, k):
        # Clamp so a (possible) trailing duplicate block never indexes out of
        # bounds; its contribution is zeroed by the in-kernel mask.
        return (jnp.minimum(j * n_inner + k, n_blocks - 1), 0)

    kernel = functools.partial(
        _focal_loss_kernel,
        alpha=float(alpha),
        gamma=float(gamma),
        block_rows=block_rows,
        n_elems=n_elems,
    )

    partials = pl.pallas_call(
        kernel,
        out_shape=jax.ShapeDtypeStruct((n_outer, 1), jnp.float32),
        grid_spec=pltpu.PrefetchScalarGridSpec(
            num_scalar_prefetch=0,
            grid=(n_outer, n_inner),
            in_specs=[
                pl.BlockSpec((block_rows, LANE), in_map),
                pl.BlockSpec((block_rows, LANE), in_map),
            ],
            out_specs=pl.BlockSpec((1, 1), lambda j, k: (j, 0),
                                   memory_space=pltpu.SMEM),
            scratch_shapes=[pltpu.VMEM((block_rows, LANE), jnp.float32)],
        ),
        compiler_params=pltpu.CompilerParams(
            dimension_semantics=("parallel", "arbitrary"),
        ),
    )(x2, t2)

    return jnp.sum(partials) / n_elems


def focal_loss_ref(inputs, targets, alpha=1.0, gamma=2.0):
    p = inputs.astype(jnp.float32)
    t = targets.astype(jnp.float32)
    bce = -(t * jnp.maximum(jnp.log(p), -100.0)
            + (1.0 - t) * jnp.maximum(jnp.log(1.0 - p), -100.0))
    pt = p * t + (1.0 - p) * (1.0 - t)
    return jnp.mean(alpha * (1.0 - pt) ** gamma * bce)


if __name__ == "__main__":
    key = jax.random.PRNGKey(0)
    k1, k2, k3, k4 = jax.random.split(key, 4)

    # 1) Default module config: NCHW probabilities, hard binary targets.
    shape = (2, 4, 16, 16)
    inputs = jax.nn.sigmoid(jax.random.normal(k1, shape, jnp.float32))
    targets = (jax.random.uniform(k2, shape) > 0.5).astype(jnp.float32)
    out = jax.block_until_ready(focal_loss_mean(inputs, targets))
    ref = focal_loss_ref(inputs, targets)
    assert jnp.allclose(out, ref, rtol=1e-5, atol=1e-6), (out, ref)

    # 2) Multi-block path with soft targets: exercises the parallel split, a
    #    ragged last block and a clamped duplicate block (small max_block_rows
    #    keeps the test tiny while covering the large-input code path).
    shape2 = (1, 3, 40, 128)  # 15360 elems -> 120 rows of 128
    p2 = jax.nn.sigmoid(jax.random.normal(k3, shape2, jnp.float32))
    t2 = jax.random.uniform(k4, shape2, dtype=jnp.float32)
    out2 = jax.block_until_ready(focal_loss_mean(p2, t2, max_block_rows=48))
    ref2 = focal_loss_ref(p2, t2)
    assert jnp.allclose(out2, ref2, rtol=1e-5, atol=1e-6), (out2, ref2)

    # 3) Non-integer gamma, alpha != 1, and a shape needing the lane pad.
    shape3 = (3, 5, 7)  # 105 elems -> padded to 128
    p3 = jax.nn.sigmoid(jax.random.normal(k3, shape3, jnp.float32))
    t3 = (jax.random.uniform(k4, shape3) > 0.5).astype(jnp.float32)
    out3 = jax.block_until_ready(focal_loss_mean(p3, t3, alpha=0.25, gamma=1.5))
    ref3 = focal_loss_ref(p3, t3, alpha=0.25, gamma=1.5)
    assert jnp.allclose(out3, ref3, rtol=1e-5, atol=1e-6), (out3, ref3)

    print("KERNEL_OK")
</pallas_src>

<mosaic_0001>
module attributes {stable_mosaic.version = 11 : i64} {
  func.func @_focal_loss_kernel(%arg0: i32, %arg1: i32, %arg2: memref<16x128xf32, #tpu.memory_space<vmem>>, %arg3: memref<16x128xf32, #tpu.memory_space<vmem>>, %arg4: memref<1x1xf32, #tpu.memory_space<smem>>, %arg5: memref<16x128xf32, #tpu.memory_space<vmem>>) attributes {dimension_semantics = [#tpu.dimension_semantics<parallel>, #tpu.dimension_semantics<arbitrary>], iteration_bounds = array<i64: 1, 1>, scalar_prefetch = 0 : i64, scratch_operands = 1 : i64, tpu.core_type = #tpu.core_type<tc>, window_params = [{transform_indices = @transform_0, window_bounds = array<i64: 16, 128>}, {transform_indices = @transform_1, window_bounds = array<i64: 16, 128>}, {transform_indices = @transform_2, window_bounds = array<i64: 1, 1>}]} {
    %c0_i32 = arith.constant 0 : i32
    %0 = arith.cmpi eq, %arg1, %c0_i32 : i32
    %1 = arith.extui %0 : i1 to i32
    %c0_i32_0 = arith.constant 0 : i32
    %2 = arith.cmpi ne, %1, %c0_i32_0 : i32
    scf.if %2 {
      %cst_18 = arith.constant 0.000000e+00 : f32
      %51 = vector.broadcast %cst_18 : f32 to vector<16x128xf32>
      %c0_19 = arith.constant 0 : index
      %c0_20 = arith.constant 0 : index
      %52 = vector.load %arg5[%c0_19, %c0_20] : memref<16x128xf32, #tpu.memory_space<vmem>>, vector<16x128xf32>
      tpu.vector_store %arg5[%c0_19, %c0_20], %51 {strides = array<i32>} : memref<16x128xf32, #tpu.memory_space<vmem>>, vector<16x128xf32>,
    } else {
    }
    %c0 = arith.constant 0 : index
    %c0_1 = arith.constant 0 : index
    %3 = vector.load %arg2[%c0, %c0_1] : memref<16x128xf32, #tpu.memory_space<vmem>>, vector<16x128xf32>
    %c0_2 = arith.constant 0 : index
    %c0_3 = arith.constant 0 : index
    %4 = vector.load %arg3[%c0_2, %c0_3] : memref<16x128xf32, #tpu.memory_space<vmem>>, vector<16x128xf32>
    %5 = math.log %3 : vector<16x128xf32>
    %cst = arith.constant -1.000000e+02 : f32
    %6 = vector.broadcast %cst : f32 to vector<16x128xf32>
    %7 = arith.maximumf %5, %6 : vector<16x128xf32>
    %cst_4 = arith.constant 1.000000e+00 : f32
    %8 = vector.broadcast %cst_4 : f32 to vector<16x128xf32>
    %9 = arith.subf %8, %3 : vector<16x128xf32>
    %10 = math.log %9 : vector<16x128xf32>
    %cst_5 = arith.constant -1.000000e+02 : f32
    %11 = vector.broadcast %cst_5 : f32 to vector<16x128xf32>
    %12 = arith.maximumf %10, %11 : vector<16x128xf32>
    %13 = arith.mulf %4, %7 : vector<16x128xf32>
    %cst_6 = arith.constant 1.000000e+00 : f32
    %14 = vector.broadcast %cst_6 : f32 to vector<16x128xf32>
    %15 = arith.subf %14, %4 : vector<16x128xf32>
    %16 = arith.mulf %15, %12 : vector<16x128xf32>
    %17 = arith.addf %13, %16 : vector<16x128xf32>
    %cst_7 = arith.constant 0.000000e+00 : f32
    %18 = vector.broadcast %cst_7 : f32 to vector<16x128xf32>
    %19 = arith.subf %18, %17 : vector<16x128xf32>
    %20 = arith.mulf %3, %4 : vector<16x128xf32>
    %cst_8 = arith.constant 1.000000e+00 : f32
    %21 = vector.broadcast %cst_8 : f32 to vector<16x128xf32>
    %22 = arith.subf %21, %3 : vector<16x128xf32>
    %cst_9 = arith.constant 1.000000e+00 : f32
    %23 = vector.broadcast %cst_9 : f32 to vector<16x128xf32>
    %24 = arith.subf %23, %4 : vector<16x128xf32>
    %25 = arith.mulf %22, %24 : vector<16x128xf32>
    %26 = arith.addf %20, %25 : vector<16x128xf32>
    %cst_10 = arith.constant 1.000000e+00 : f32
    %27 = vector.broadcast %cst_10 : f32 to vector<16x128xf32>
    %28 = arith.subf %27, %26 : vector<16x128xf32>
    %29 = arith.mulf %28, %28 : vector<16x128xf32>
    %30 = arith.mulf %29, %19 : vector<16x128xf32>
    %c1_i32 = arith.constant 1 : i32
    %31 = arith.muli %arg0, %c1_i32 : i32
    %32 = arith.addi %31, %arg1 : i32
    %33 = tpu.iota {dimensions = array<i32: 0>} : vector<16x128xi32>
    %34 = tpu.iota {dimensions = array<i32: 1>} : vector<16x128xi32>
    %c16_i32 = arith.constant 16 : i32
    %35 = arith.muli %32, %c16_i32 : i32
    %36 = vector.broadcast %35 : i32 to vector<16x128xi32>
    %37 = arith.addi %36, %33 : vector<16x128xi32>
    %c128_i32 = arith.constant 128 : i32
    %38 = vector.broadcast %c128_i32 : i32 to vector<16x128xi32>
    %39 = arith.muli %37, %38 : vector<16x128xi32>
    %40 = arith.addi %39, %34 : vector<16x128xi32>
    %c2048_i32 = arith.constant 2048 : i32
    %41 = vector.broadcast %c2048_i32 : i32 to vector<16x128xi32>
    %42 = arith.cmpi slt, %40, %41 : vector<16x128xi32>
    %cst_11 = arith.constant 0.000000e+00 : f32
    %43 = vector.broadcast %cst_11 : f32 to vector<16x128xf32>
    %44 = arith.select %42, %30, %43 : vector<16x128xi1>, vector<16x128xf32>
    %c0_12 = arith.constant 0 : index
    %c0_13 = arith.constant 0 : index
    %45 = vector.load %arg5[%c0_12, %c0_13] : memref<16x128xf32, #tpu.memory_space<vmem>>, vector<16x128xf32>
    %46 = arith.addf %45, %44 : vector<16x128xf32>
    %c0_14 = arith.constant 0 : index
    %c0_15 = arith.constant 0 : index
    %47 = vector.load %arg5[%c0_14, %c0_15] : memref<16x128xf32, #tpu.memory_space<vmem>>, vector<16x128xf32>
    tpu.vector_store %arg5[%c0_14, %c0_15], %46 {strides = array<i32>} : memref<16x128xf32, #tpu.memory_space<vmem>>, vector<16x128xf32>,
    %c0_i32_16 = arith.constant 0 : i32
    %48 = arith.cmpi eq, %arg1, %c0_i32_16 : i32
    %49 = arith.extui %48 : i1 to i32
    %c0_i32_17 = arith.constant 0 : i32
    %50 = arith.cmpi ne, %49, %c0_i32_17 : i32
    scf.if %50 {
      %c0_18 = arith.constant 0 : index
      %c0_19 = arith.constant 0 : index
      %51 = vector.load %arg5[%c0_18, %c0_19] : memref<16x128xf32, #tpu.memory_space<vmem>>, vector<16x128xf32>
      %52 = vector.shape_cast %51 : vector<16x128xf32> to vector<1x16x128xf32>
      %cst_20 = arith.constant dense<0.000000e+00> : vector<1xf32>
      %53 = vector.multi_reduction <add>, %52, %cst_20 [1, 2] : vector<1x16x128xf32> to vector<1xf32>
      %54 = vector.shape_cast %53 : vector<1xf32> to vector<1x1x1xf32>
      %55 = vector.extract %54[0, 0, 0] : f32 from vector<1x1x1xf32>
      %c0_21 = arith.constant 0 : index
      %c0_22 = arith.constant 0 : index
      %56 = memref.load %arg4[%c0_21, %c0_22] : memref<1x1xf32, #tpu.memory_space<smem>>
      memref.store %55, %arg4[%c0_21, %c0_22] : memref<1x1xf32, #tpu.memory_space<smem>>
    } else {
    }
    return
  }
  func.func @transform_0(%arg0: i32, %arg1: i32) -> (i32, i32) {
    %c1_i32 = arith.constant 1 : i32
    %0 = arith.muli %arg0, %c1_i32 : i32
    %1 = arith.addi %0, %arg1 : i32
    %c0_i32 = arith.constant 0 : i32
    %2 = arith.minsi %1, %c0_i32 : i32
    %c0_i32_0 = arith.constant 0 : i32
    %c0_i32_1 = arith.constant 0 : i32
    return %2, %c0_i32_0 : i32, i32
  }
  func.func @transform_1(%arg0: i32, %arg1: i32) -> (i32, i32) {
    %c1_i32 = arith.constant 1 : i32
    %0 = arith.muli %arg0, %c1_i32 : i32
    %1 = arith.addi %0, %arg1 : i32
    %c0_i32 = arith.constant 0 : i32
    %2 = arith.minsi %1, %c0_i32 : i32
    %c0_i32_0 = arith.constant 0 : i32
    %c0_i32_1 = arith.constant 0 : i32
    return %2, %c0_i32_0 : i32, i32
  }
  func.func @transform_2(%arg0: i32, %arg1: i32) -> (i32, i32) {
    %c0_i32 = arith.constant 0 : i32
    %c0_i32_0 = arith.constant 0 : i32
    return %arg0, %c0_i32 : i32, i32
  }
}

</mosaic_0001>

<llo_original>
// kernel: tpu_custom_call.1
$region0: #{tpu_custom_call.1}
  #allocation0 [shape = 'u32[]', space=smem, size = 0x4, offset = 0x4, fixed_abs, tag = 'smem constant byte address 0x4 - core index']
  #allocation1 [shape = 'u32[144,128]{1,0:T(1,128)}', space=vmem, size = 0x12000, scoped, tag = 'internal scratch']
  #allocation2 [shape = 'f32[16,128]{1,0:T(8,128)}', space=vmem, size = 0x2000, scoped, tag = 'scratch operand']
  %s0 = inlined_call_operand.hbm [shape: f32[16,128], index: 0, kind: input, shape index: {}]
  %s1 = inlined_call_operand.hbm [shape: f32[16,128], index: 1, kind: input, shape index: {}]
  %s2 = inlined_call_operand.hbm [shape: f32[1,1], index: 2, kind: output, shape index: {}]
  %s3 = sld [smem:[#allocation0]]
  $region34: #{tpu_custom_call.1} parent=0
    _
  %s5 = ssub.s32 1, %s3
  %s6 = scalar_select 0, %s5, %s3
  $region1: #{tpu_custom_call.1} parent=0
    #allocation3 [shape = 'u8[8192]{0}', space=vmem, size = 0x2000, scoped, tag = 'input window, operand 0, single buffered']
    #allocation4 [shape = 's32[1]{0}', space=sflag, size = 0x4, scoped, tag = 'scoped memory for tpu_custom_call.1']
    #allocation5 [shape = 's32[1]{0}', space=sflag, size = 0x4, scoped, tag = 'scoped memory for tpu_custom_call.1']
    #allocation6 [shape = 'u8[8192]{0}', space=vmem, size = 0x2000, scoped, tag = 'input window, operand 1, single buffered']
    #allocation7 [shape = 's32[1]{0}', space=sflag, size = 0x4, scoped, tag = 'scoped memory for tpu_custom_call.1']
    #allocation8 [shape = 'u8[512]{0}', space=smem, size = 0x200, scoped, tag = 'output window, operand 0, single buffered']
    %7 = vsyncpa [#allocation4], 0
    %8 = vsyncpa [#allocation7], 0
    %9 = vsyncpa [#allocation5], 0
    // Predicated region
    $region2: #{tpu_custom_call.1} parent=1 // pred_check
      _
    $region3: #{tpu_custom_call.1} parent=1 // pred_check_branch
      %11 = sbr.rel (0) target = $region5
    $region4: #{tpu_custom_call.1} parent=1 // pred_region
      %s12 = sadd.s32 0, 0
      %p13 = scmp.lt.s32.totalorder %s12, 0
      %s14 = scalar_select %p13, %s12, 0
      %s15 = smul.u32 2, %s14
      %s17 = ssub.s32 256, 256
      %18 = vsyncadd [#allocation4], %s17
      %s19 = smul.addr %s15, 128
      %s20 = scalar_lea.hbm %s0, %s19
      %s21 = sshll.u32 [#allocation3], 4
      %s22 = int_to_ptr.vmem [resolvable:$true] %s21
      %27 = dma.hbm_to_vmem [thread:$0]  %s20, 256, %s22, [#allocation4], 128, 128, 8
    $region5: #{tpu_custom_call.1} parent=1 // pred_fallthru
      _
    // Predicated region
    $region6: #{tpu_custom_call.1} parent=1 // pred_check
      _
    $region7: #{tpu_custom_call.1} parent=1 // pred_check_branch
      %29 = sbr.rel (0) target = $region9
    $region8: #{tpu_custom_call.1} parent=1 // pred_region
      %s30 = sadd.s32 0, 0
      %p31 = scmp.lt.s32.totalorder %s30, 0
      %s32 = scalar_select %p31, %s30, 0
      %s33 = smul.u32 2, %s32
      %s35 = ssub.s32 256, 256
      %36 = vsyncadd [#allocation7], %s35
      %s37 = smul.addr %s33, 128
      %s38 = scalar_lea.hbm %s1, %s37
      %s39 = sshll.u32 [#allocation6], 4
      %s40 = int_to_ptr.vmem [resolvable:$true] %s39
      %45 = dma.hbm_to_vmem [thread:$0]  %s38, 256, %s40, [#allocation7], 128, 128, 8
    $region9: #{tpu_custom_call.1} parent=1 // pred_fallthru
      _
    // Predicated region
    $region10: #{tpu_custom_call.1} parent=1 // pred_check
      _
    $region11: #{tpu_custom_call.1} parent=1 // pred_check_branch
      %47 = sbr.rel (0) target = $region13
    $region12: #{tpu_custom_call.1} parent=1 // pred_region
      %48 = dma.done [#allocation4], 256
    $region13: #{tpu_custom_call.1} parent=1 // pred_fallthru
      _
    // Predicated region
    $region14: #{tpu_custom_call.1} parent=1 // pred_check
      _
    $region15: #{tpu_custom_call.1} parent=1 // pred_check_branch
      %50 = sbr.rel (0) target = $region17
    $region16: #{tpu_custom_call.1} parent=1 // pred_region
      %51 = dma.done [#allocation7], 256
    $region17: #{tpu_custom_call.1} parent=1 // pred_fallthru
      _
    %s52 = sadd.s32 0, 0
    %p53 = scmp.lt.s32.totalorder %s52, 0
    %s54 = scalar_select %p53, %s52, 0
    %s55 = smul.u32 2, %s54
    %s56 = sadd.s32 0, 0
    %p57 = scmp.lt.s32.totalorder %s56, 0
    %s58 = scalar_select %p57, %s56, 0
    %s59 = smul.u32 2, %s58
    %p60 = scmp.eq.s32.totalorder 0, 0
    // Predicated region
    $region18: #{tpu_custom_call.1} parent=1 // pred_check
      %p61 = pneg %p60
    $region19: #{tpu_custom_call.1} parent=1 // pred_check_branch
      %63 = sbr.rel (%p61) target = $region21
    $region20: #{tpu_custom_call.1} parent=1 // pred_region
      %64 = vst [vmem:[#allocation2] sm:$0xff] 0.0
      %65 = vst [vmem:[#allocation2 + $0x8] sm:$0xff] 0.0
    $region21: #{tpu_custom_call.1} parent=1 // pred_fallthru
      _
    %v66 = vld [vmem:[#allocation3] sm:$0xff]
    %v67 = vld [vmem:[#allocation3 + $0x8] sm:$0xff]
    %v68 = vld [vmem:[#allocation6] sm:$0xff]
    %v69 = vld [vmem:[#allocation6 + $0x8] sm:$0xff]
    %v70 = vlog2.pop %v66
    %v71 = vmul.f32 %v70, 0.6931472
    %v72 = vlog2.pop %v67
    %v73 = vmul.f32 %v72, 0.6931472
    %v74 = vmax.f32 %v71, -100.0
    %v75 = vmax.f32 %v73, -100.0
    %v76 = vsub.f32 1.0, %v66
    %v77 = vsub.f32 1.0, %v67
    %v78 = vlog2.pop %v76
    %v79 = vmul.f32 %v78, 0.6931472
    %v80 = vlog2.pop %v77
    %v81 = vmul.f32 %v80, 0.6931472
    %v82 = vmax.f32 %v79, -100.0
    %v83 = vmax.f32 %v81, -100.0
    %v84 = vmul.f32 %v68, %v74
    %v85 = vmul.f32 %v69, %v75
    %v86 = vsub.f32 1.0, %v68
    %v87 = vsub.f32 1.0, %v69
    %v88 = vmul.f32 %v86, %v82
    %v89 = vmul.f32 %v87, %v83
    %v90 = vadd.f32 %v84, %v88
    %v91 = vadd.f32 %v85, %v89
    %v92 = vsub.f32 0.0, %v90
    %v93 = vsub.f32 0.0, %v91
    %v94 = vmul.f32 %v66, %v68
    %v95 = vmul.f32 %v67, %v69
    %v96 = vmul.f32 %v76, %v86
    %v97 = vmul.f32 %v77, %v87
    %v98 = vadd.f32 %v94, %v96
    %v99 = vadd.f32 %v95, %v97
    %v100 = vsub.f32 1.0, %v98
    %v101 = vsub.f32 1.0, %v99
    %v102 = vmul.f32 %v100, %v100
    %v103 = vmul.f32 %v101, %v101
    %v104 = vmul.f32 %v102, %v92
    %v105 = vmul.f32 %v103, %v93
    %s106 = sadd.s32 0, 0
    %v107 = vlaneseq
    %v108 = vshrl.u32 %v107, 7
    %v109 = vadd.s32 %v108, 8
    %v110 = vlaneseq
    %v111 = vand.u32 %v110, 127
    %s112 = smul.u32 %s106, 16
    %v113 = vstv %s112
    %v114 = vadd.s32 %v113, %v108
    %v115 = vadd.s32 %v113, %v109
    %v116 = vmul.u32 %v114, 128
    %v117 = vmul.u32 %v115, 128
    %v118 = vadd.s32 %v116, %v111
    %v119 = vadd.s32 %v117, %v111
    %vm120 = vcmp.lt.s32.totalorder %v118, 2048
    %vm121 = vcmp.lt.s32.totalorder %v119, 2048
    %v122 = vsel %vm120, %v104, 0.0
    %v123 = vsel %vm121, %v105, 0.0
    %v124 = vld [vmem:[#allocation2] sm:$0xff]
    %v125 = vld [vmem:[#allocation2 + $0x8] sm:$0xff]
    %v126 = vadd.f32 %v124, %v122
    %v127 = vadd.f32 %v125, %v123
    %128 = vst [vmem:[#allocation2] sm:$0xff] %v126
    %129 = vst [vmem:[#allocation2 + $0x8] sm:$0xff] %v127
    // Predicated region
    $region22: #{tpu_custom_call.1} parent=1 // pred_check
      %p130 = pneg %p60
    $region23: #{tpu_custom_call.1} parent=1 // pred_check_branch
      %132 = sbr.rel (%p130) target = $region25
    $region24: #{tpu_custom_call.1} parent=1 // pred_region
      %v133 = vld [vmem:[#allocation2] sm:$0xff]
      %v134 = vld [vmem:[#allocation2 + $0x8] sm:$0xff]
      %v135 = vadd.f32 %v133, %v134
      %136 = vadd.xlane.f32.xlu0 %v135
      %v137 = vpop.xlane.xlu0 %136
      %v138 = vrot.slane %v137, 4
      %v139 = vadd.f32 %v137, %v138
      %v140 = vrot.slane %v139, 2
      %v141 = vadd.f32 %v139, %v140
      %v142 = vrot.slane %v141, 1
      %v143 = vadd.f32 %v141, %v142
      %s144 = vtos %v143
      %s145 = scalar_lea.smem [#allocation8], 0
      %146 = sst [smem:[%s145]] %s144
    $region25: #{tpu_custom_call.1} parent=1 // pred_fallthru
      _
    // Predicated region
    $region26: #{tpu_custom_call.1} parent=1 // pred_check
      _
    $region27: #{tpu_custom_call.1} parent=1 // pred_check_branch
      %148 = sbr.rel (0) target = $region29
    $region28: #{tpu_custom_call.1} parent=1 // pred_region
      %s150 = ssub.s32 16, 16
      %151 = vsyncadd [#allocation5], %s150
      %154 = dma.smem_to_hbm [#allocation8], 16, %s2, [#allocation5]
    $region29: #{tpu_custom_call.1} parent=1 // pred_fallthru
      _
    // Predicated region
    $region30: #{tpu_custom_call.1} parent=1 // pred_check
      _
    $region31: #{tpu_custom_call.1} parent=1 // pred_check_branch
      %156 = sbr.rel (0) target = $region33
    $region32: #{tpu_custom_call.1} parent=1 // pred_region
      %157 = dma.done [#allocation5], 16
    $region33: #{tpu_custom_call.1} parent=1 // pred_fallthru
      _
    %158 = sfence
    %159 = vsyncpa [#allocation4], 1
    %160 = vsyncpa [#allocation7], 1
    %161 = vsyncpa [#allocation5], 1

</llo_original>
